<compile_context>
chip_gen: v7x
topology: tpu7x:2x2x1
jax: 0.10.0
libtpu: 0.0.40
codegen_flags: <defaults>
</compile_context>

<pallas_src>
import math
import numpy as np
import jax
import jax.numpy as jnp
from jax import lax
from jax.experimental import pallas as pl
from jax.experimental.pallas import tpu as pltpu


def _round_up(n, m):
    return ((n + m - 1) // m) * m


def _weight_norm_kernel(v_ref, g_ref, w_ref):
    # v_ref: (tn, Kp)   g_ref: (tn, 1)   w_ref: (Kp, tn)  (pre-transposed for the matmul)
    v = v_ref[...].astype(jnp.float32)
    ssq = jnp.sum(v * v, axis=-1, keepdims=True)                       # (tn, 1), XLU reduce
    # rsqrt on the EUP; the max() only guards zero-padded rows (their g is also 0).
    scale = g_ref[...].astype(jnp.float32) * lax.rsqrt(jnp.maximum(ssq, 1e-30))
    w_ref[...] = (v * scale).T.astype(w_ref.dtype)                     # small per-block transpose


def _matmul_bias_kernel(x_ref, w_ref, b_ref, o_ref):
    # x_ref: (tm, Kp)   w_ref: (Kp, Np)   b_ref: (1, Np)   o_ref: (tm, Np)
    acc = jnp.dot(x_ref[...], w_ref[...], preferred_element_type=jnp.float32)
    o_ref[...] = (acc + b_ref[...].astype(jnp.float32)).astype(o_ref.dtype)


def linear_nd(x, v, g, b, *, tm=128, x_buffers=2, compute_dtype=None):
    """Weight-normed Linear over the last dim of an ND input x.

    x: (..., K)   v: (N, K)   g: (N, 1)   b: (1, N)   ->   (..., N)

    tm:            row tile (128 default; 256 for large M on v6e/v7x if VMEM allows).
    x_buffers:     pipeline depth for the streaming x row tiles (sweep 2 vs 3).
    compute_dtype: optional MXU operand dtype for x / normed weight (e.g. jnp.bfloat16 on
                   v5e); accumulation stays f32 and the output keeps x.dtype.
    """
    size = x.shape
    K = size[-1]
    N = v.shape[0]
    M = int(math.prod(size[:-1])) if len(size) > 1 else 1

    out_dtype = x.dtype
    op_dtype = jnp.dtype(compute_dtype) if compute_dtype is not None else jnp.dtype(x.dtype)

    x2d = x.reshape(M, K)
    if x2d.dtype != op_dtype:
        x2d = x2d.astype(op_dtype)

    # Lane padding for K (contraction correctness) and N (lane-dense unmasked stores).
    Kp = _round_up(K, 128)
    Np = _round_up(N, 128)

    # Sublane alignment; only pad M when it is smaller than one sublane group (cheap).
    sub = 8 if jnp.dtype(op_dtype).itemsize == 4 else 16
    Mrows = max(M, sub)

    if (Mrows, Kp) != (M, K):
        x2d = jnp.pad(x2d, ((0, Mrows - M), (0, Kp - K)))
    v_p = jnp.pad(v, ((0, Np - N), (0, Kp - K))) if (Np, Kp) != (N, K) else v
    g_p = jnp.pad(g, ((0, Np - N), (0, 0))) if Np != N else g
    b_p = jnp.pad(b, ((0, 0), (0, Np - N))) if Np != N else b

    # Adaptive row tile: don't burn MXU work on a mostly-empty tile, and keep >= 2 row tiles
    # when possible so v7x's two TensorCores can split the "parallel" M axis.
    m_al = _round_up(Mrows, sub)
    if m_al < tm:
        tm = m_al if m_al < 2 * sub else _round_up(-(-m_al // 2), sub)

    xb = jnp.dtype(op_dtype).itemsize
    ob = jnp.dtype(out_dtype).itemsize
    bb = jnp.dtype(b_p.dtype).itemsize
    vb = jnp.dtype(v_p.dtype).itemsize

    # ---- Stage 1: weight norm + transpose, tiled over N (runs once per call). ----
    tn = 256 if Np % 256 == 0 else 128
    s1_need = (2 * tn * Kp * vb            # v tiles (double-buffered)
               + 2 * tn * 4                # g tiles
               + 2 * Kp * tn * xb          # transposed output tiles
               + 3 * tn * Kp * 4)          # f32 upcast / product / transpose temporaries
    s1_limit = min(max(int(s1_need * 1.3) + (2 << 20), 32 << 20), 128 << 20)

    w = pl.pallas_call(
        _weight_norm_kernel,
        out_shape=jax.ShapeDtypeStruct((Kp, Np), op_dtype),
        grid_spec=pltpu.PrefetchScalarGridSpec(
            num_scalar_prefetch=0,
            grid=(Np // tn,),
            in_specs=[
                pl.BlockSpec((tn, Kp), lambda i: (i, 0)),   # v rows for this output-col block
                pl.BlockSpec((tn, 1), lambda i: (i, 0)),    # matching g rows
            ],
            out_specs=pl.BlockSpec((Kp, tn), lambda i: (0, i)),
        ),
        compiler_params=pltpu.CompilerParams(
            dimension_semantics=("parallel",),
            vmem_limit_bytes=s1_limit),
    )(v_p, g_p)

    # ---- Stage 2: row-tiled (tm, Kp) x (Kp, Np) matmul + bias, parallel over row tiles. ----
    # Explicit VMEM budget: streaming x tiles + single-buffered weight/bias + output tiles.
    need = (x_buffers * tm * Kp * xb       # x row tiles
            + Kp * Np * xb                 # resident weight (single-buffered)
            + Np * bb                      # bias (single-buffered)
            + 2 * tm * Np * ob)            # output row tiles
    vmem_limit = min(max(int(need * 1.3) + (2 << 20), 32 << 20), 128 << 20)

    def _stage2(use_buffering_hints):
        def spec(shape, imap, nbuf):
            if use_buffering_hints:
                return pl.BlockSpec(shape, imap, pipeline_mode=pl.Buffered(nbuf))
            return pl.BlockSpec(shape, imap)

        return pl.pallas_call(
            _matmul_bias_kernel,
            out_shape=jax.ShapeDtypeStruct((Mrows, Np), out_dtype),
            grid_spec=pltpu.PrefetchScalarGridSpec(
                num_scalar_prefetch=0,
                grid=(pl.cdiv(Mrows, tm),),          # ragged last tile masked on store
                in_specs=[
                    spec((tm, Kp), lambda i: (i, 0), x_buffers),   # streaming x row tile
                    spec((Kp, Np), lambda i: (0, 0), 1),           # resident weight: 1 buffer
                    spec((1, Np), lambda i: (0, 0), 1),            # resident bias: 1 buffer
                ],
                out_specs=pl.BlockSpec((tm, Np), lambda i: (i, 0)),  # lane-dense (Np%128==0)
            ),
            compiler_params=pltpu.CompilerParams(
                dimension_semantics=("parallel",),
                vmem_limit_bytes=vmem_limit),
        )(x2d, w, b_p)

    try:
        out2d = _stage2(True)
    except Exception:
        # Older builds without per-operand buffering hints: same kernel, default buffering.
        out2d = _stage2(False)

    out2d = out2d[:M, :N]
    return out2d.reshape(size[:-1] + (N,))


if __name__ == "__main__":
    # Deterministic synthetic parameters (no checkpoint load).
    in_features, out_features = 32, 64
    batch, seq = 2, 8                      # leading dims -> M = 16 rows

    key = jax.random.PRNGKey(0)
    kx, kv, kg, kb = jax.random.split(key, 4)

    bound = 1.0 / math.sqrt(in_features)   # nn.Linear default init range
    x = jax.random.normal(kx, (batch, seq, in_features), dtype=jnp.float32)
    v = jax.random.uniform(kv, (out_features, in_features),
                           minval=-bound, maxval=bound, dtype=jnp.float32)
    g = jax.random.uniform(kg, (out_features, 1),
                           minval=0.5, maxval=1.5, dtype=jnp.float32)
    b = jax.random.uniform(kb, (1, out_features),
                           minval=-bound, maxval=bound, dtype=jnp.float32)

    out = linear_nd(x, v, g, b)
    out = jax.block_until_ready(out)

    # Reference check (plain JAX), mirrors the PyTorch weight-normed Linear forward exactly.
    w_eff = v * (g / jnp.linalg.norm(v, axis=-1, keepdims=True))
    ref = (x.reshape(-1, in_features) @ w_eff.T + b).reshape(batch, seq, out_features)
    assert out.shape == (batch, seq, out_features)
    np.testing.assert_allclose(np.asarray(out), np.asarray(ref), rtol=1e-5, atol=1e-5)

    print("KERNEL_OK")
</pallas_src>

<mosaic_0001>
module attributes {stable_mosaic.version = 11 : i64} {
  func.func @_weight_norm_kernel(%arg0: i32, %arg1: memref<128x128xf32, #tpu.memory_space<vmem>>, %arg2: memref<128x1xf32, #tpu.memory_space<vmem>>, %arg3: memref<128x128xf32, #tpu.memory_space<vmem>>) attributes {dimension_semantics = [#tpu.dimension_semantics<parallel>], iteration_bounds = array<i64: 1>, scalar_prefetch = 0 : i64, scratch_operands = 0 : i64, tpu.core_type = #tpu.core_type<tc>, window_params = [{transform_indices = @transform_0, window_bounds = array<i64: 128, 128>}, {transform_indices = @transform_1, window_bounds = array<i64: 128, 1>}, {transform_indices = @transform_2, window_bounds = array<i64: 128, 128>}]} {
    %c0 = arith.constant 0 : index
    %c0_0 = arith.constant 0 : index
    %0 = vector.load %arg1[%c0, %c0_0] : memref<128x128xf32, #tpu.memory_space<vmem>>, vector<128x128xf32>
    %1 = arith.mulf %0, %0 : vector<128x128xf32>
    %cst = arith.constant dense<0.000000e+00> : vector<128xf32>
    %2 = vector.multi_reduction <add>, %1, %cst [1] : vector<128x128xf32> to vector<128xf32>
    %3 = vector.shape_cast %2 : vector<128xf32> to vector<128x1xf32>
    %c0_1 = arith.constant 0 : index
    %c0_2 = arith.constant 0 : index
    %4 = vector.load %arg2[%c0_1, %c0_2] : memref<128x1xf32, #tpu.memory_space<vmem>>, vector<128x1xf32>
    %cst_3 = arith.constant 1.000000e-30 : f32
    %5 = vector.broadcast %cst_3 : f32 to vector<128x1xf32>
    %6 = arith.maximumf %3, %5 : vector<128x1xf32>
    %7 = math.rsqrt %6 : vector<128x1xf32>
    %8 = arith.mulf %4, %7 : vector<128x1xf32>
    %9 = vector.broadcast %8 : vector<128x1xf32> to vector<128x128xf32>
    %10 = arith.mulf %0, %9 : vector<128x128xf32>
    %11 = tpu.transpose %10, [1, 0] : vector<128x128xf32> -> vector<128x128xf32>
    %c0_4 = arith.constant 0 : index
    %c0_5 = arith.constant 0 : index
    %12 = vector.load %arg3[%c0_4, %c0_5] : memref<128x128xf32, #tpu.memory_space<vmem>>, vector<128x128xf32>
    tpu.vector_store %arg3[%c0_4, %c0_5], %11 {strides = array<i32>} : memref<128x128xf32, #tpu.memory_space<vmem>>, vector<128x128xf32>,
    return
  }
  func.func @transform_0(%arg0: i32) -> (i32, i32) {
    %c0_i32 = arith.constant 0 : i32
    %c0_i32_0 = arith.constant 0 : i32
    return %arg0, %c0_i32 : i32, i32
  }
  func.func @transform_1(%arg0: i32) -> (i32, i32) {
    %c0_i32 = arith.constant 0 : i32
    %c0_i32_0 = arith.constant 0 : i32
    return %arg0, %c0_i32 : i32, i32
  }
  func.func @transform_2(%arg0: i32) -> (i32, i32) {
    %c0_i32 = arith.constant 0 : i32
    %c0_i32_0 = arith.constant 0 : i32
    return %c0_i32, %arg0 : i32, i32
  }
}

</mosaic_0001>

<llo_original>
// kernel: tpu_custom_call.1
$region0: #{tpu_custom_call.1}
  #allocation0 [shape = 'u32[]', space=smem, size = 0x4, offset = 0x4, fixed_abs, tag = 'smem constant byte address 0x4 - core index']
  #allocation1 [shape = 'u32[144,128]{1,0:T(1,128)}', space=vmem, size = 0x12000, scoped, tag = 'internal scratch']
  %s0 = inlined_call_operand.vmem [shape: f32[128,128], index: 0, kind: input, shape index: {}]
  %s1 = inlined_call_operand.vmem [shape: f32[128,1], index: 1, kind: input, shape index: {}]
  %s2 = inlined_call_operand.hbm [shape: f32[128,128], index: 2, kind: output, shape index: {}]
  %s3 = sld [smem:[#allocation0]]
  $region18: #{tpu_custom_call.1} parent=0
    _
  %s5 = ssub.s32 1, %s3
  %s6 = scalar_select 0, %s5, %s3
  $region1: #{tpu_custom_call.1} parent=0
    #allocation2 [shape = 'u8[65536]{0}', space=vmem, size = 0x10000, scoped, tag = 'output window, operand 0, single buffered']
    #allocation3 [shape = 's32[1]{0}', space=sflag, size = 0x4, scoped, tag = 'scoped memory for tpu_custom_call.1']
    %7 = vsyncpa [#allocation3], 0
    // Predicated region
    $region2: #{tpu_custom_call.1} parent=1 // pred_check
      _
    $region3: #{tpu_custom_call.1} parent=1 // pred_check_branch
      %9 = sbr.rel (0) target = $region5
    $region4: #{tpu_custom_call.1} parent=1 // pred_region
      _
    $region5: #{tpu_custom_call.1} parent=1 // pred_fallthru
      _
    // Predicated region
    $region6: #{tpu_custom_call.1} parent=1 // pred_check
      _
    $region7: #{tpu_custom_call.1} parent=1 // pred_check_branch
      %11 = sbr.rel (0) target = $region9
    $region8: #{tpu_custom_call.1} parent=1 // pred_region
      _
    $region9: #{tpu_custom_call.1} parent=1 // pred_fallthru
      _
    %v12 = vld [vmem:[%s0] sm:$0xff]
    %v13 = vld [vmem:[%s0 + $0x8] sm:$0xff]
    %v14 = vld [vmem:[%s0 + $0x10] sm:$0xff]
    %v15 = vld [vmem:[%s0 + $0x18] sm:$0xff]
    %v16 = vld [vmem:[%s0 + $0x20] sm:$0xff]
    %v17 = vld [vmem:[%s0 + $0x28] sm:$0xff]
    %v18 = vld [vmem:[%s0 + $0x30] sm:$0xff]
    %v19 = vld [vmem:[%s0 + $0x38] sm:$0xff]
    %v20 = vld [vmem:[%s0 + $0x40] sm:$0xff]
    %v21 = vld [vmem:[%s0 + $0x48] sm:$0xff]
    %v22 = vld [vmem:[%s0 + $0x50] sm:$0xff]
    %v23 = vld [vmem:[%s0 + $0x58] sm:$0xff]
    %v24 = vld [vmem:[%s0 + $0x60] sm:$0xff]
    %v25 = vld [vmem:[%s0 + $0x68] sm:$0xff]
    %v26 = vld [vmem:[%s0 + $0x70] sm:$0xff]
    %v27 = vld [vmem:[%s0 + $0x78] sm:$0xff]
    %v28 = vmul.f32 %v12, %v12
    %v29 = vmul.f32 %v13, %v13
    %v30 = vmul.f32 %v14, %v14
    %v31 = vmul.f32 %v15, %v15
    %v32 = vmul.f32 %v16, %v16
    %v33 = vmul.f32 %v17, %v17
    %v34 = vmul.f32 %v18, %v18
    %v35 = vmul.f32 %v19, %v19
    %v36 = vmul.f32 %v20, %v20
    %v37 = vmul.f32 %v21, %v21
    %v38 = vmul.f32 %v22, %v22
    %v39 = vmul.f32 %v23, %v23
    %v40 = vmul.f32 %v24, %v24
    %v41 = vmul.f32 %v25, %v25
    %v42 = vmul.f32 %v26, %v26
    %v43 = vmul.f32 %v27, %v27
    %44 = vadd.xlane.f32.xlu0 %v28
    %v45 = vpop.xlane.xlu0 %44
    %46 = vadd.xlane.f32.xlu0 %v29
    %v47 = vpop.xlane.xlu0 %46
    %48 = vadd.xlane.f32.xlu0 %v30
    %v49 = vpop.xlane.xlu0 %48
    %50 = vadd.xlane.f32.xlu0 %v31
    %v51 = vpop.xlane.xlu0 %50
    %52 = vadd.xlane.f32.xlu0 %v32
    %v53 = vpop.xlane.xlu0 %52
    %54 = vadd.xlane.f32.xlu0 %v33
    %v55 = vpop.xlane.xlu0 %54
    %56 = vadd.xlane.f32.xlu0 %v34
    %v57 = vpop.xlane.xlu0 %56
    %58 = vadd.xlane.f32.xlu0 %v35
    %v59 = vpop.xlane.xlu0 %58
    %60 = vadd.xlane.f32.xlu0 %v36
    %v61 = vpop.xlane.xlu0 %60
    %62 = vadd.xlane.f32.xlu0 %v37
    %v63 = vpop.xlane.xlu0 %62
    %64 = vadd.xlane.f32.xlu0 %v38
    %v65 = vpop.xlane.xlu0 %64
    %66 = vadd.xlane.f32.xlu0 %v39
    %v67 = vpop.xlane.xlu0 %66
    %68 = vadd.xlane.f32.xlu0 %v40
    %v69 = vpop.xlane.xlu0 %68
    %70 = vadd.xlane.f32.xlu0 %v41
    %v71 = vpop.xlane.xlu0 %70
    %72 = vadd.xlane.f32.xlu0 %v42
    %v73 = vpop.xlane.xlu0 %72
    %74 = vadd.xlane.f32.xlu0 %v43
    %v75 = vpop.xlane.xlu0 %74
    %v76 = vld [vmem:[%s1] sm:$0xff]
    %v77 = vld [vmem:[%s1 + $0x8] sm:$0xff]
    %v78 = vld [vmem:[%s1 + $0x10] sm:$0xff]
    %v79 = vld [vmem:[%s1 + $0x18] sm:$0xff]
    %v80 = vld [vmem:[%s1 + $0x20] sm:$0xff]
    %v81 = vld [vmem:[%s1 + $0x28] sm:$0xff]
    %v82 = vld [vmem:[%s1 + $0x30] sm:$0xff]
    %v83 = vld [vmem:[%s1 + $0x38] sm:$0xff]
    %v84 = vld [vmem:[%s1 + $0x40] sm:$0xff]
    %v85 = vld [vmem:[%s1 + $0x48] sm:$0xff]
    %v86 = vld [vmem:[%s1 + $0x50] sm:$0xff]
    %v87 = vld [vmem:[%s1 + $0x58] sm:$0xff]
    %v88 = vld [vmem:[%s1 + $0x60] sm:$0xff]
    %v89 = vld [vmem:[%s1 + $0x68] sm:$0xff]
    %v90 = vld [vmem:[%s1 + $0x70] sm:$0xff]
    %v91 = vld [vmem:[%s1 + $0x78] sm:$0xff]
    %v92 = vmax.f32 %v45, 1e-30
    %v93 = vmax.f32 %v47, 1e-30
    %v94 = vmax.f32 %v49, 1e-30
    %v95 = vmax.f32 %v51, 1e-30
    %v96 = vmax.f32 %v53, 1e-30
    %v97 = vmax.f32 %v55, 1e-30
    %v98 = vmax.f32 %v57, 1e-30
    %v99 = vmax.f32 %v59, 1e-30
    %v100 = vmax.f32 %v61, 1e-30
    %v101 = vmax.f32 %v63, 1e-30
    %v102 = vmax.f32 %v65, 1e-30
    %v103 = vmax.f32 %v67, 1e-30
    %v104 = vmax.f32 %v69, 1e-30
    %v105 = vmax.f32 %v71, 1e-30
    %v106 = vmax.f32 %v73, 1e-30
    %v107 = vmax.f32 %v75, 1e-30
    %v108 = vrsqrt.pop %v92
    %v109 = vrsqrt.pop %v93
    %v110 = vrsqrt.pop %v94
    %v111 = vrsqrt.pop %v95
    %v112 = vrsqrt.pop %v96
    %v113 = vrsqrt.pop %v97
    %v114 = vrsqrt.pop %v98
    %v115 = vrsqrt.pop %v99
    %v116 = vrsqrt.pop %v100
    %v117 = vrsqrt.pop %v101
    %v118 = vrsqrt.pop %v102
    %v119 = vrsqrt.pop %v103
    %v120 = vrsqrt.pop %v104
    %v121 = vrsqrt.pop %v105
    %v122 = vrsqrt.pop %v106
    %v123 = vrsqrt.pop %v107
    %v124 = vmul.f32 %v76, %v108
    %v125 = vmul.f32 %v77, %v109
    %v126 = vmul.f32 %v78, %v110
    %v127 = vmul.f32 %v79, %v111
    %v128 = vmul.f32 %v80, %v112
    %v129 = vmul.f32 %v81, %v113
    %v130 = vmul.f32 %v82, %v114
    %v131 = vmul.f32 %v83, %v115
    %v132 = vmul.f32 %v84, %v116
    %v133 = vmul.f32 %v85, %v117
    %v134 = vmul.f32 %v86, %v118
    %v135 = vmul.f32 %v87, %v119
    %v136 = vmul.f32 %v88, %v120
    %v137 = vmul.f32 %v89, %v121
    %v138 = vmul.f32 %v90, %v122
    %v139 = vmul.f32 %v91, %v123
    %141 = vset.pattern.permute.xlu0 0
    %142 = vperm.xlu0 %141, %v124
    %v143 = vpop.permute.xlu0 %142
    %146 = vset.pattern.permute.xlu0 0
    %147 = vperm.xlu0 %146, %v125
    %v148 = vpop.permute.xlu0 %147
    %151 = vset.pattern.permute.xlu0 0
    %152 = vperm.xlu0 %151, %v126
    %v153 = vpop.permute.xlu0 %152
    %156 = vset.pattern.permute.xlu0 0
    %157 = vperm.xlu0 %156, %v127
    %v158 = vpop.permute.xlu0 %157
    %161 = vset.pattern.permute.xlu0 0
    %162 = vperm.xlu0 %161, %v128
    %v163 = vpop.permute.xlu0 %162
    %166 = vset.pattern.permute.xlu0 0
    %167 = vperm.xlu0 %166, %v129
    %v168 = vpop.permute.xlu0 %167
    %171 = vset.pattern.permute.xlu0 0
    %172 = vperm.xlu0 %171, %v130
    %v173 = vpop.permute.xlu0 %172
    %176 = vset.pattern.permute.xlu0 0
    %177 = vperm.xlu0 %176, %v131
    %v178 = vpop.permute.xlu0 %177
    %181 = vset.pattern.permute.xlu0 0
    %182 = vperm.xlu0 %181, %v132
    %v183 = vpop.permute.xlu0 %182
    %186 = vset.pattern.permute.xlu0 0
    %187 = vperm.xlu0 %186, %v133
    %v188 = vpop.permute.xlu0 %187
    %191 = vset.pattern.permute.xlu0 0
    %192 = vperm.xlu0 %191, %v134
    %v193 = vpop.permute.xlu0 %192
    %196 = vset.pattern.permute.xlu0 0
    %197 = vperm.xlu0 %196, %v135
    %v198 = vpop.permute.xlu0 %197
    %201 = vset.pattern.permute.xlu0 0
    %202 = vperm.xlu0 %201, %v136
    %v203 = vpop.permute.xlu0 %202
    %206 = vset.pattern.permute.xlu0 0
    %207 = vperm.xlu0 %206, %v137
    %v208 = vpop.permute.xlu0 %207
    %211 = vset.pattern.permute.xlu0 0
    %212 = vperm.xlu0 %211, %v138
    %v213 = vpop.permute.xlu0 %212
    %216 = vset.pattern.permute.xlu0 0
    %217 = vperm.xlu0 %216, %v139
    %v218 = vpop.permute.xlu0 %217
    %v220 = vmul.f32 %v12, %v143
    %v221 = vmul.f32 %v13, %v148
    %v222 = vmul.f32 %v14, %v153
    %v223 = vmul.f32 %v15, %v158
    %v224 = vmul.f32 %v16, %v163
    %v225 = vmul.f32 %v17, %v168
    %v226 = vmul.f32 %v18, %v173
    %v227 = vmul.f32 %v19, %v178
    %v228 = vmul.f32 %v20, %v183
    %v229 = vmul.f32 %v21, %v188
    %v230 = vmul.f32 %v22, %v193
    %v231 = vmul.f32 %v23, %v198
    %v232 = vmul.f32 %v24, %v203
    %v233 = vmul.f32 %v25, %v208
    %v234 = vmul.f32 %v26, %v213
    %v235 = vmul.f32 %v27, %v218
    %236 = vxpose.xlu0.b32.start [1/16] %v220, 128
    %237 = vxpose.xlu0.b32.cont [2/16] %v221, 128
    %238 = vxpose.xlu0.b32.cont [3/16] %v222, 128
    %239 = vxpose.xlu0.b32.cont [4/16] %v223, 128
    %240 = vxpose.xlu0.b32.cont [5/16] %v224, 128
    %241 = vxpose.xlu0.b32.cont [6/16] %v225, 128
    %242 = vxpose.xlu0.b32.cont [7/16] %v226, 128
    %243 = vxpose.xlu0.b32.cont [8/16] %v227, 128
    %244 = vxpose.xlu0.b32.cont [9/16] %v228, 128
    %245 = vxpose.xlu0.b32.cont [10/16] %v229, 128
    %246 = vxpose.xlu0.b32.cont [11/16] %v230, 128
    %247 = vxpose.xlu0.b32.cont [12/16] %v231, 128
    %248 = vxpose.xlu0.b32.cont [13/16] %v232, 128
    %249 = vxpose.xlu0.b32.cont [14/16] %v233, 128
    %250 = vxpose.xlu0.b32.cont [15/16] %v234, 128
    %251 = vxpose.xlu0.b32.end [16/16] %v235, 128
    %v252 = vpop.trf.xlu0
    %v253 = vpop.trf.xlu0
    %v254 = vpop.trf.xlu0
    %v255 = vpop.trf.xlu0
    %v256 = vpop.trf.xlu0
    %v257 = vpop.trf.xlu0
    %v258 = vpop.trf.xlu0
    %v259 = vpop.trf.xlu0
    %v260 = vpop.trf.xlu0
    %v261 = vpop.trf.xlu0
    %v262 = vpop.trf.xlu0
    %v263 = vpop.trf.xlu0
    %v264 = vpop.trf.xlu0
    %v265 = vpop.trf.xlu0
    %v266 = vpop.trf.xlu0
    %v267 = vpop.trf.xlu0
    %268 = vst [vmem:[#allocation2] sm:$0xff] %v252
    %269 = vst [vmem:[#allocation2 + $0x8] sm:$0xff] %v253
    %270 = vst [vmem:[#allocation2 + $0x10] sm:$0xff] %v254
    %271 = vst [vmem:[#allocation2 + $0x18] sm:$0xff] %v255
    %272 = vst [vmem:[#allocation2 + $0x20] sm:$0xff] %v256
    %273 = vst [vmem:[#allocation2 + $0x28] sm:$0xff] %v257
    %274 = vst [vmem:[#allocation2 + $0x30] sm:$0xff] %v258
    %275 = vst [vmem:[#allocation2 + $0x38] sm:$0xff] %v259
    %276 = vst [vmem:[#allocation2 + $0x40] sm:$0xff] %v260
    %277 = vst [vmem:[#allocation2 + $0x48] sm:$0xff] %v261
    %278 = vst [vmem:[#allocation2 + $0x50] sm:$0xff] %v262
    %279 = vst [vmem:[#allocation2 + $0x58] sm:$0xff] %v263
    %280 = vst [vmem:[#allocation2 + $0x60] sm:$0xff] %v264
    %281 = vst [vmem:[#allocation2 + $0x68] sm:$0xff] %v265
    %282 = vst [vmem:[#allocation2 + $0x70] sm:$0xff] %v266
    %283 = vst [vmem:[#allocation2 + $0x78] sm:$0xff] %v267
    // Predicated region
    $region10: #{tpu_custom_call.1} parent=1 // pred_check
      _
    $region11: #{tpu_custom_call.1} parent=1 // pred_check_branch
      %285 = sbr.rel (0) target = $region13
    $region12: #{tpu_custom_call.1} parent=1 // pred_region
      %s287 = ssub.s32 2048, 2048
      %288 = vsyncadd [#allocation3], %s287
      %s289 = sshll.u32 [#allocation2], 4
      %s290 = int_to_ptr.vmem [resolvable:$true] %s289
      %295 = dma.vmem_to_hbm [thread:$0]  %s290, 2048, %s2, [#allocation3], 128, 128, 8
    $region13: #{tpu_custom_call.1} parent=1 // pred_fallthru
      _
    // Predicated region
    $region14: #{tpu_custom_call.1} parent=1 // pred_check
      _
    $region15: #{tpu_custom_call.1} parent=1 // pred_check_branch
      %297 = sbr.rel (0) target = $region17
    $region16: #{tpu_custom_call.1} parent=1 // pred_region
      %298 = dma.done [#allocation3], 2048
    $region17: #{tpu_custom_call.1} parent=1 // pred_fallthru
      _
    %299 = vsyncpa [#allocation3], 1

</llo_original>
